<compile_context>
chip_gen: v6e
topology: v6e:2x2x1
jax: 0.10.0
libtpu: 0.0.40
codegen_flags: <defaults>
</compile_context>

<pallas_src>
import functools

import jax
import jax.numpy as jnp
import numpy as np
from jax.experimental import pallas as pl
from jax.experimental.pallas import tpu as pltpu

LANE = 128


def _round_up(a, b):
    return (a + b - 1) // b * b


# ---------------- one-time parameter packing (NOT in the forward path) ----------------

def pack_moe_params(params, *, num_experts, compute_dtype=jnp.float32):
    """Repack PyTorch-layout MoE params into fused, lane-dense matmul operands (call once)."""
    E = num_experts
    d_model, d_ff = params["w1"].shape[1], params["w1"].shape[2]
    out_dim = params["w2"].shape[-1]

    e_pad = _round_up(E, LANE)          # padded expert axis (lane-dense gate output)
    d_ff_pad = _round_up(d_ff, LANE)    # per-expert hidden block, lane aligned
    out_pad = _round_up(out_dim, LANE)  # padded output axis (unmasked vst)
    ed = E * d_ff_pad

    # gating: padded gate columns get bias -1e30 -> softmax weight exactly 0 (f32 bias add)
    wg_pad = jnp.zeros((d_model, e_pad), jnp.float32).at[:, :E].set(params["wg"])
    bg_pad = jnp.full((1, e_pad), -1e30, jnp.float32).at[:, :E].set(params["bg"])

    # expert up-projection, concatenated along N: (d_model, E*d_ff_pad), padded cols are zero
    w1 = jnp.transpose(params["w1"], (1, 0, 2))                              # (d_model, E, d_ff)
    w1 = jnp.pad(w1, ((0, 0), (0, 0), (0, d_ff_pad - d_ff))).reshape(d_model, ed)
    b1 = jnp.pad(params["b1"], ((0, 0), (0, d_ff_pad - d_ff))).reshape(1, ed)

    # expert down-projection, concatenated along K: (E*d_ff_pad, out_pad), padded rows/cols zero
    w2 = jnp.pad(params["w2"], ((0, 0), (0, d_ff_pad - d_ff), (0, out_pad - out_dim)))
    w2 = w2.reshape(ed, out_pad)
    b2 = jnp.zeros((e_pad, out_pad), jnp.float32).at[:E, :out_dim].set(params["b2"])

    # fused operands:
    #   r   = x @ w_fused + b_fused ; logits = r[:, :e_pad] ; h_pre = r[:, e_pad:]
    #   y   = [h*c | c] @ w2b       (bias combine folded into K)
    w_fused = jnp.concatenate([wg_pad, w1], axis=1).astype(compute_dtype)    # (d_model, e_pad+ed)
    b_fused = jnp.concatenate([bg_pad, b1], axis=1).astype(jnp.float32)      # (1, e_pad+ed), f32
    w2b = jnp.concatenate([w2, b2], axis=0).astype(compute_dtype)            # (ed+e_pad, out_pad)

    return {"w_fused": w_fused, "b_fused": b_fused, "w2b": w2b}


# ---------------- fused Pallas kernel ----------------

def moe_kernel(x_ref, wf_ref, bf_ref, w2b_ref, o_ref, w_out_ref, *,
               num_experts, shared_experts, k, e_pad, d_ff_pad):
    """Fused gating + top-k + dense expert combine for one batch tile.

    Shapes (per grid step):
      x_ref   : (TB, d_model)                 compute dtype (f32 or bf16)
      wf_ref  : (d_model, e_pad + E*d_ff_pad) fused [Wg | W1] (resident)
      bf_ref  : (1, e_pad + E*d_ff_pad)       fused [bg | b1], f32
      w2b_ref : (E*d_ff_pad + e_pad, out_pad) fused [[W2],[b2]] (resident)
      o_ref   : (TB, out_pad)                 w_out_ref : (TB, e_pad)
    """
    tb = x_ref.shape[0]

    # ---- one wide MXU matmul for gating + expert-up (same LHS, same K) -------------------
    r = jnp.dot(x_ref[...], wf_ref[...], preferred_element_type=jnp.float32) + bf_ref[...]
    logits = r[:, :e_pad]                                    # 128-lane aligned slice
    h = jnp.maximum(r[:, e_pad:], 0.0)                       # (TB, E*d_ff_pad), relu

    # ---- softmax over (padded) expert axis, f32 -------------------------------------------
    m = jnp.max(logits, axis=-1, keepdims=True)
    ex = jnp.exp(logits - m)
    all_w = ex / jnp.sum(ex, axis=-1, keepdims=True)         # padded cols are exactly 0
    w_out_ref[...] = all_w.astype(w_out_ref.dtype)

    # ---- exact top-k selection mask (ties -> lowest index, matching lax.top_k) ------------
    col = jax.lax.broadcasted_iota(jnp.int32, all_w.shape, 1)
    selected = jnp.zeros(all_w.shape, jnp.bool_)
    for _ in range(k):                                        # k is tiny (2): static unroll
        masked = jnp.where(selected, -1.0, all_w)             # all_w >= 0, so -1 < everything
        mmax = jnp.max(masked, axis=-1, keepdims=True)
        is_max = masked == mmax
        first = jnp.min(jnp.where(is_max, col, e_pad), axis=-1, keepdims=True)
        selected = jnp.logical_or(selected, col == first)

    # per-(token, expert) combine coefficients:
    #   shared experts -> 1/S ; selected specific experts -> gate weight ; rest -> 0
    inv_s = (1.0 / shared_experts) if shared_experts > 0 else 0.0
    c = jnp.where(col < shared_experts, inv_s,
                  jnp.where(selected, all_w, 0.0))            # (TB, e_pad), f32

    # ---- per-expert broadcast of c onto the hidden axis (VALU only, no expand matrix) -----
    c_exp = jnp.concatenate(
        [jnp.broadcast_to(c[:, e:e + 1], (tb, d_ff_pad)) for e in range(num_experts)],
        axis=-1)                                              # (TB, E*d_ff_pad)

    # ---- down projection with the bias combine folded along K -----------------------------
    lhs = jnp.concatenate([h * c_exp, c], axis=-1).astype(w2b_ref.dtype)
    y = jnp.dot(lhs, w2b_ref[...], preferred_element_type=jnp.float32)
    o_ref[...] = y.astype(o_ref.dtype)


# ---------------- forward wrapper (packed params only; no repacking per call) ----------------

@functools.partial(jax.jit, static_argnames=("num_experts", "shared_experts", "k", "out_dim"))
def moe_forward(x, w_fused, b_fused, w2b, *, num_experts, shared_experts, k, out_dim):
    B, d_model = x.shape
    E = num_experts
    e_pad = _round_up(E, LANE)
    ncols = w_fused.shape[1]                  # e_pad + E*d_ff_pad
    d_ff_pad = (ncols - e_pad) // E
    ed = E * d_ff_pad
    out_pad = w2b.shape[1]
    compute_dtype = w_fused.dtype

    # --- batch tiling: at least 2 grid steps so both v7x TensorCores get work --------------
    tile_b = min(256, _round_up(max((B + 1) // 2, 1), 8))
    b_pad = max(_round_up(B, tile_b), 2 * tile_b)
    grid_b = b_pad // tile_b

    x_p = x.astype(compute_dtype)
    if b_pad != B:
        x_p = jnp.zeros((b_pad, d_model), compute_dtype).at[:B].set(x_p)

    kernel = functools.partial(moe_kernel, num_experts=E, shared_experts=shared_experts,
                               k=k, e_pad=e_pad, d_ff_pad=d_ff_pad)

    # --- scheduler hints + explicit scoped-VMEM budget --------------------------------------
    itemsz = jnp.dtype(compute_dtype).itemsize
    flops = 2 * b_pad * d_model * ncols + 2 * b_pad * (ed + e_pad) * out_pad
    bytes_accessed = (b_pad * d_model * itemsz + w_fused.size * itemsz + b_fused.size * 4
                      + w2b.size * itemsz + b_pad * out_pad * 4 + b_pad * e_pad * 4)
    block_bytes = (tile_b * d_model * itemsz + w_fused.size * itemsz + b_fused.size * 4
                   + w2b.size * itemsz + tile_b * (out_pad + e_pad) * 4)
    vmem_limit = int(min(100 * 2**20, max(16 * 2**20, 4 * block_bytes)))

    out_p, all_w_p = pl.pallas_call(
        kernel,
        grid=(grid_b,),
        in_specs=[
            pl.BlockSpec((tile_b, d_model), lambda i: (i, 0)),     # x tile, pipelined over batch
            pl.BlockSpec((d_model, ncols), lambda i: (0, 0)),      # fused [Wg | W1] (resident)
            pl.BlockSpec((1, ncols), lambda i: (0, 0)),            # fused [bg | b1]
            pl.BlockSpec((ed + e_pad, out_pad), lambda i: (0, 0)),  # fused [[W2],[b2]] (resident)
        ],
        out_specs=[
            pl.BlockSpec((tile_b, out_pad), lambda i: (i, 0)),
            pl.BlockSpec((tile_b, e_pad), lambda i: (i, 0)),
        ],
        out_shape=[
            jax.ShapeDtypeStruct((b_pad, out_pad), jnp.float32),
            jax.ShapeDtypeStruct((b_pad, e_pad), jnp.float32),
        ],
        compiler_params=pltpu.CompilerParams(
            dimension_semantics=("parallel",),                     # megacore-shardable batch axis
            vmem_limit_bytes=vmem_limit),
        cost_estimate=pl.CostEstimate(flops=flops, transcendentals=b_pad * e_pad,
                                      bytes_accessed=bytes_accessed),
    )(x_p, w_fused, b_fused, w2b)

    return out_p[:B, :out_dim], all_w_p[:B, :E]


# ---------------- pure-JAX reference (for correctness check) ----------------

def moe_reference(x, params, *, num_experts, shared_experts, k):
    logits = x @ params["wg"] + params["bg"][0]
    all_w = jax.nn.softmax(logits, axis=-1)
    topk_w, topk_idx = jax.lax.top_k(all_w, k)

    def expert(e, xx):
        h = jnp.maximum(xx @ params["w1"][e] + params["b1"][e], 0.0)
        return h @ params["w2"][e] + params["b2"][e]

    shared = sum(expert(e, x) for e in range(shared_experts)) / shared_experts
    specific = jnp.zeros((x.shape[0], params["w2"].shape[-1]), jnp.float32)
    for i in range(k):
        idx = topk_idx[:, i]
        w = topk_w[:, i:i + 1]
        for j in range(shared_experts, num_experts):
            mask = (idx == j).astype(jnp.float32)[:, None]
            specific = specific + w * mask * expert(j, x)
    return shared + specific, all_w


# ---------------- parameter init ----------------

def init_params(key, d_model, d_ff, output_dim, num_experts):
    ks = jax.random.split(key, 6)
    scale1 = 1.0 / np.sqrt(d_model)
    scale2 = 1.0 / np.sqrt(d_ff)
    return {
        "wg": jax.random.uniform(ks[0], (d_model, num_experts), jnp.float32, -scale1, scale1),
        "bg": jax.random.uniform(ks[1], (1, num_experts), jnp.float32, -scale1, scale1),
        # Stacked expert weights: index 0..shared-1 are shared experts, the rest are specific.
        "w1": jax.random.uniform(ks[2], (num_experts, d_model, d_ff), jnp.float32, -scale1, scale1),
        "b1": jax.random.uniform(ks[3], (num_experts, d_ff), jnp.float32, -scale1, scale1),
        "w2": jax.random.uniform(ks[4], (num_experts, d_ff, output_dim), jnp.float32, -scale2, scale2),
        "b2": jax.random.uniform(ks[5], (num_experts, output_dim), jnp.float32, -scale2, scale2),
    }


if __name__ == "__main__":
    B, d_model, d_ff, output_dim = 8, 32, 64, 32
    num_experts, shared_experts, k = 6, 2, 2

    key = jax.random.PRNGKey(0)
    kx, kp = jax.random.split(key)
    x = jax.random.normal(kx, (B, d_model), jnp.float32)
    params = init_params(kp, d_model, d_ff, output_dim, num_experts)

    ref_out, ref_w = moe_reference(
        x, params, num_experts=num_experts, shared_experts=shared_experts, k=k)

    # ---- f32 path (exact check vs. reference) ----
    packed = pack_moe_params(params, num_experts=num_experts, compute_dtype=jnp.float32)
    packed = jax.tree_util.tree_map(jax.block_until_ready, packed)   # one-time packing
    out, all_weights = moe_forward(
        x, packed["w_fused"], packed["b_fused"], packed["w2b"],
        num_experts=num_experts, shared_experts=shared_experts, k=k, out_dim=output_dim)
    out = jax.block_until_ready(out)
    all_weights = jax.block_until_ready(all_weights)

    assert out.shape == (B, output_dim)
    assert all_weights.shape == (B, num_experts)
    np.testing.assert_allclose(np.asarray(all_weights), np.asarray(ref_w), rtol=1e-4, atol=1e-4)
    np.testing.assert_allclose(np.asarray(out), np.asarray(ref_out), rtol=1e-4, atol=1e-4)

    # ---- bf16-operand production path (f32 accumulation / gating math); loose check ----
    packed_bf16 = pack_moe_params(params, num_experts=num_experts, compute_dtype=jnp.bfloat16)
    out_b, all_w_b = moe_forward(
        x, packed_bf16["w_fused"], packed_bf16["b_fused"], packed_bf16["w2b"],
        num_experts=num_experts, shared_experts=shared_experts, k=k, out_dim=output_dim)
    out_b = jax.block_until_ready(out_b)
    all_w_b = jax.block_until_ready(all_w_b)
    assert out_b.shape == (B, output_dim) and bool(jnp.all(jnp.isfinite(out_b)))
    np.testing.assert_allclose(np.asarray(all_w_b), np.asarray(ref_w), rtol=5e-2, atol=5e-2)

    print("KERNEL_OK")
</pallas_src>

<mosaic_0001>
module attributes {stable_mosaic.version = 11 : i64} {
  func.func @moe_kernel(%arg0: i32, %arg1: memref<8x32xf32, #tpu.memory_space<vmem>>, %arg2: memref<32x896xf32, #tpu.memory_space<vmem>>, %arg3: memref<1x896xf32, #tpu.memory_space<vmem>>, %arg4: memref<896x128xf32, #tpu.memory_space<vmem>>, %arg5: memref<8x128xf32, #tpu.memory_space<vmem>>, %arg6: memref<8x128xf32, #tpu.memory_space<vmem>>) attributes {dimension_semantics = [#tpu.dimension_semantics<parallel>], iteration_bounds = array<i64: 2>, scalar_prefetch = 0 : i64, scratch_operands = 0 : i64, tpu.core_type = #tpu.core_type<tc>, window_params = [{transform_indices = @transform_0, window_bounds = array<i64: 8, 32>}, {pipeline_mode = #tpu.pipeline_mode<synchronous>, transform_indices = @transform_1, window_bounds = array<i64: 32, 896>}, {pipeline_mode = #tpu.pipeline_mode<synchronous>, transform_indices = @transform_2, window_bounds = array<i64: 1, 896>}, {pipeline_mode = #tpu.pipeline_mode<synchronous>, transform_indices = @transform_3, window_bounds = array<i64: 896, 128>}, {transform_indices = @transform_4, window_bounds = array<i64: 8, 128>}, {transform_indices = @transform_5, window_bounds = array<i64: 8, 128>}]} {
    %c0 = arith.constant 0 : index
    %c0_0 = arith.constant 0 : index
    %0 = vector.load %arg1[%c0, %c0_0] : memref<8x32xf32, #tpu.memory_space<vmem>>, vector<8x32xf32>
    %c0_1 = arith.constant 0 : index
    %c0_2 = arith.constant 0 : index
    %1 = vector.load %arg2[%c0_1, %c0_2] : memref<32x896xf32, #tpu.memory_space<vmem>>, vector<32x896xf32>
    %cst = arith.constant dense<0.000000e+00> : vector<8x896xf32>
    %2 = tpu.matmul %0, %1, %cst {dimension_numbers = #tpu.dot_dimension_numbers<[1], [0], [0], [1], [0, 0, 1, 1], [], []>} : vector<8x32xf32>, vector<32x896xf32>, vector<8x896xf32> -> vector<8x896xf32>
    %c0_3 = arith.constant 0 : index
    %c0_4 = arith.constant 0 : index
    %3 = vector.load %arg3[%c0_3, %c0_4] : memref<1x896xf32, #tpu.memory_space<vmem>>, vector<1x896xf32>
    %4 = vector.broadcast %3 : vector<1x896xf32> to vector<8x896xf32>
    %5 = arith.addf %2, %4 : vector<8x896xf32>
    %6 = vector.extract_strided_slice %5 {offsets = [0, 0], sizes = [8, 128], strides = [1, 1]} : vector<8x896xf32> to vector<8x128xf32>
    %7 = vector.extract_strided_slice %5 {offsets = [0, 128], sizes = [8, 768], strides = [1, 1]} : vector<8x896xf32> to vector<8x768xf32>
    %cst_5 = arith.constant 0.000000e+00 : f32
    %8 = vector.broadcast %cst_5 : f32 to vector<8x768xf32>
    %9 = arith.maximumf %7, %8 : vector<8x768xf32>
    %cst_6 = arith.constant dense<0xFF800000> : vector<8xf32>
    %10 = vector.multi_reduction <maximumf>, %6, %cst_6 [1] : vector<8x128xf32> to vector<8xf32>
    %11 = vector.shape_cast %10 : vector<8xf32> to vector<8x1xf32>
    %12 = vector.broadcast %11 : vector<8x1xf32> to vector<8x128xf32>
    %13 = arith.subf %6, %12 : vector<8x128xf32>
    %14 = math.exp %13 : vector<8x128xf32>
    %cst_7 = arith.constant dense<0.000000e+00> : vector<8xf32>
    %15 = vector.multi_reduction <add>, %14, %cst_7 [1] : vector<8x128xf32> to vector<8xf32>
    %16 = vector.shape_cast %15 : vector<8xf32> to vector<8x1xf32>
    %17 = vector.broadcast %16 : vector<8x1xf32> to vector<8x128xf32>
    %18 = arith.divf %14, %17 : vector<8x128xf32>
    %c0_8 = arith.constant 0 : index
    %c0_9 = arith.constant 0 : index
    %19 = vector.load %arg6[%c0_8, %c0_9] : memref<8x128xf32, #tpu.memory_space<vmem>>, vector<8x128xf32>
    tpu.vector_store %arg6[%c0_8, %c0_9], %18 {strides = array<i32>} : memref<8x128xf32, #tpu.memory_space<vmem>>, vector<8x128xf32>,
    %20 = tpu.iota {dimensions = array<i32: 1>} : vector<8x128xi32>
    %false = arith.constant false
    %21 = vector.broadcast %false : i1 to vector<8x128xi1>
    %cst_10 = arith.constant -1.000000e+00 : f32
    %22 = vector.broadcast %cst_10 : f32 to vector<8x128xf32>
    %23 = arith.select %21, %22, %18 : vector<8x128xi1>, vector<8x128xf32>
    %cst_11 = arith.constant dense<0xFF800000> : vector<8xf32>
    %24 = vector.multi_reduction <maximumf>, %23, %cst_11 [1] : vector<8x128xf32> to vector<8xf32>
    %25 = vector.shape_cast %24 : vector<8xf32> to vector<8x1xf32>
    %26 = vector.broadcast %25 : vector<8x1xf32> to vector<8x128xf32>
    %27 = arith.cmpf oeq, %23, %26 : vector<8x128xf32>
    %c128_i32 = arith.constant 128 : i32
    %28 = vector.broadcast %c128_i32 : i32 to vector<8x128xi32>
    %29 = arith.select %27, %20, %28 : vector<8x128xi1>, vector<8x128xi32>
    %cst_12 = arith.constant dense<2147483647> : vector<8xi32>
    %30 = vector.multi_reduction <minsi>, %29, %cst_12 [1] : vector<8x128xi32> to vector<8xi32>
    %31 = vector.shape_cast %30 : vector<8xi32> to vector<8x1xi32>
    %32 = vector.broadcast %31 : vector<8x1xi32> to vector<8x128xi32>
    %33 = arith.cmpi eq, %20, %32 : vector<8x128xi32>
    %34 = arith.ori %21, %33 : vector<8x128xi1>
    %cst_13 = arith.constant -1.000000e+00 : f32
    %35 = vector.broadcast %cst_13 : f32 to vector<8x128xf32>
    %36 = arith.select %34, %35, %18 : vector<8x128xi1>, vector<8x128xf32>
    %cst_14 = arith.constant dense<0xFF800000> : vector<8xf32>
    %37 = vector.multi_reduction <maximumf>, %36, %cst_14 [1] : vector<8x128xf32> to vector<8xf32>
    %38 = vector.shape_cast %37 : vector<8xf32> to vector<8x1xf32>
    %39 = vector.broadcast %38 : vector<8x1xf32> to vector<8x128xf32>
    %40 = arith.cmpf oeq, %36, %39 : vector<8x128xf32>
    %c128_i32_15 = arith.constant 128 : i32
    %41 = vector.broadcast %c128_i32_15 : i32 to vector<8x128xi32>
    %42 = arith.select %40, %20, %41 : vector<8x128xi1>, vector<8x128xi32>
    %cst_16 = arith.constant dense<2147483647> : vector<8xi32>
    %43 = vector.multi_reduction <minsi>, %42, %cst_16 [1] : vector<8x128xi32> to vector<8xi32>
    %44 = vector.shape_cast %43 : vector<8xi32> to vector<8x1xi32>
    %45 = vector.broadcast %44 : vector<8x1xi32> to vector<8x128xi32>
    %46 = arith.cmpi eq, %20, %45 : vector<8x128xi32>
    %47 = arith.ori %34, %46 : vector<8x128xi1>
    %c2_i32 = arith.constant 2 : i32
    %48 = vector.broadcast %c2_i32 : i32 to vector<8x128xi32>
    %49 = arith.cmpi slt, %20, %48 : vector<8x128xi32>
    %cst_17 = arith.constant 0.000000e+00 : f32
    %50 = vector.broadcast %cst_17 : f32 to vector<8x128xf32>
    %51 = arith.select %47, %18, %50 : vector<8x128xi1>, vector<8x128xf32>
    %cst_18 = arith.constant 5.000000e-01 : f32
    %52 = vector.broadcast %cst_18 : f32 to vector<8x128xf32>
    %53 = arith.select %49, %52, %51 : vector<8x128xi1>, vector<8x128xf32>
    %54 = vector.extract_strided_slice %53 {offsets = [0, 0], sizes = [8, 1], strides = [1, 1]} : vector<8x128xf32> to vector<8x1xf32>
    %55 = vector.shape_cast %54 : vector<8x1xf32> to vector<8x1xf32>
    %56 = vector.broadcast %55 : vector<8x1xf32> to vector<8x128xf32>
    %57 = vector.extract_strided_slice %53 {offsets = [0, 1], sizes = [8, 1], strides = [1, 1]} : vector<8x128xf32> to vector<8x1xf32>
    %58 = vector.shape_cast %57 : vector<8x1xf32> to vector<8x1xf32>
    %59 = vector.broadcast %58 : vector<8x1xf32> to vector<8x128xf32>
    %60 = vector.extract_strided_slice %53 {offsets = [0, 2], sizes = [8, 1], strides = [1, 1]} : vector<8x128xf32> to vector<8x1xf32>
    %61 = vector.shape_cast %60 : vector<8x1xf32> to vector<8x1xf32>
    %62 = vector.broadcast %61 : vector<8x1xf32> to vector<8x128xf32>
    %63 = vector.extract_strided_slice %53 {offsets = [0, 3], sizes = [8, 1], strides = [1, 1]} : vector<8x128xf32> to vector<8x1xf32>
    %64 = vector.shape_cast %63 : vector<8x1xf32> to vector<8x1xf32>
    %65 = vector.broadcast %64 : vector<8x1xf32> to vector<8x128xf32>
    %66 = vector.extract_strided_slice %53 {offsets = [0, 4], sizes = [8, 1], strides = [1, 1]} : vector<8x128xf32> to vector<8x1xf32>
    %67 = vector.shape_cast %66 : vector<8x1xf32> to vector<8x1xf32>
    %68 = vector.broadcast %67 : vector<8x1xf32> to vector<8x128xf32>
    %69 = vector.extract_strided_slice %53 {offsets = [0, 5], sizes = [8, 1], strides = [1, 1]} : vector<8x128xf32> to vector<8x1xf32>
    %70 = vector.shape_cast %69 : vector<8x1xf32> to vector<8x1xf32>
    %71 = vector.broadcast %70 : vector<8x1xf32> to vector<8x128xf32>
    %72 = tpu.concatenate %56, %59, %62, %65, %68, %71 in 1 : vector<8x128xf32>, vector<8x128xf32>, vector<8x128xf32>, vector<8x128xf32>, vector<8x128xf32>, vector<8x128xf32> -> vector<8x768xf32>
    %73 = arith.mulf %9, %72 : vector<8x768xf32>
    %74 = tpu.concatenate %73, %53 in 1 : vector<8x768xf32>, vector<8x128xf32> -> vector<8x896xf32>
    %c0_19 = arith.constant 0 : index
    %c0_20 = arith.constant 0 : index
    %75 = vector.load %arg4[%c0_19, %c0_20] : memref<896x128xf32, #tpu.memory_space<vmem>>, vector<896x128xf32>
    %cst_21 = arith.constant dense<0.000000e+00> : vector<8x128xf32>
    %76 = tpu.matmul %74, %75, %cst_21 {dimension_numbers = #tpu.dot_dimension_numbers<[1], [0], [0], [1], [0, 0, 1, 1], [], []>} : vector<8x896xf32>, vector<896x128xf32>, vector<8x128xf32> -> vector<8x128xf32>
    %c0_22 = arith.constant 0 : index
    %c0_23 = arith.constant 0 : index
    %77 = vector.load %arg5[%c0_22, %c0_23] : memref<8x128xf32, #tpu.memory_space<vmem>>, vector<8x128xf32>
    tpu.vector_store %arg5[%c0_22, %c0_23], %76 {strides = array<i32>} : memref<8x128xf32, #tpu.memory_space<vmem>>, vector<8x128xf32>,
    return
  }
  func.func @transform_0(%arg0: i32) -> (i32, i32) {
    %c0_i32 = arith.constant 0 : i32
    %c0_i32_0 = arith.constant 0 : i32
    return %arg0, %c0_i32 : i32, i32
  }
  func.func @transform_1(%arg0: i32) -> (i32, i32) {
    %c0_i32 = arith.constant 0 : i32
    %c0_i32_0 = arith.constant 0 : i32
    %c0_i32_1 = arith.constant 0 : i32
    return %c0_i32, %c0_i32_0 : i32, i32
  }
  func.func @transform_2(%arg0: i32) -> (i32, i32) {
    %c0_i32 = arith.constant 0 : i32
    %c0_i32_0 = arith.constant 0 : i32
    %c0_i32_1 = arith.constant 0 : i32
    return %c0_i32, %c0_i32_0 : i32, i32
  }
  func.func @transform_3(%arg0: i32) -> (i32, i32) {
    %c0_i32 = arith.constant 0 : i32
    %c0_i32_0 = arith.constant 0 : i32
    %c0_i32_1 = arith.constant 0 : i32
    return %c0_i32, %c0_i32_0 : i32, i32
  }
  func.func @transform_4(%arg0: i32) -> (i32, i32) {
    %c0_i32 = arith.constant 0 : i32
    %c0_i32_0 = arith.constant 0 : i32
    return %arg0, %c0_i32 : i32, i32
  }
  func.func @transform_5(%arg0: i32) -> (i32, i32) {
    %c0_i32 = arith.constant 0 : i32
    %c0_i32_0 = arith.constant 0 : i32
    return %arg0, %c0_i32 : i32, i32
  }
}

</mosaic_0001>

<llo_original>
// kernel: moe_forward.1
$region0: #{moe_forward.1}
  #allocation0 [shape = 'u32[]', space=smem, size = 0x4, offset = 0x4, fixed_abs, tag = 'smem constant byte address 0x4 - core index']
  #allocation1 [shape = 'u32[144,128]{1,0:T(1,128)}', space=vmem, size = 0x12000, scoped, tag = 'internal scratch']
  %s0 = inlined_call_operand.vmem [shape: f32[16,32], index: 0, kind: input, shape index: {}]
  %s1 = inlined_call_operand.hbm [shape: f32[32,896], index: 1, kind: input, shape index: {}]
  %s2 = inlined_call_operand.vmem [shape: f32[1,896], index: 2, kind: input, shape index: {}]
  %s3 = inlined_call_operand.hbm [shape: f32[896,128], index: 3, kind: input, shape index: {}]
  %s4 = inlined_call_operand.vmem [shape: f32[16,128], index: 4, kind: output, shape index: {0}]
  %s5 = inlined_call_operand.vmem [shape: f32[16,128], index: 5, kind: output, shape index: {1}]
  %6 = xla_tuple %s4, %s5
  %s7 = sld [smem:[#allocation0]]
  $region65: #{moe_forward.1} parent=0
    _
  %s9 = ssub.s32 1, %s7
  %s10 = scalar_select 0, %s9, %s7
  $region1: #{moe_forward.1} parent=0
    #allocation2 [shape = 'u8[114688]{0}', space=vmem, size = 0x1c000, scoped, tag = 'input window, operand 1, single buffered']
    #allocation3 [shape = 's32[2]{0}', space=sflag, size = 0x8, scoped, tag = 'scoped memory for moe_forward.1']
    #allocation4 [shape = 'u8[458752]{0}', space=vmem, size = 0x70000, scoped, tag = 'input window, operand 3, single buffered']
    #allocation5 [shape = 's32[1]{0}', space=sflag, size = 0x4, scoped, tag = 'scoped memory for moe_forward.1']
    %11 = vsyncpa [#allocation3], 0
    %12 = vsyncpa [#allocation5], 0
    loop: start=0, step=1, limit=4
    $region2: #{moe_forward.1} parent=1 // loop_pre_header
      _
    $region3: #{moe_forward.1} parent=1 // loop_header
      %s14 = sphi 0, %s18
      %p15 = scmp.ge.s32.totalorder %s14, 4
      %s24 = sphi 0, %s26
      %s27 = sphi 0, %s24
      %s28 = sphi 0, %s27
      %s44 = sphi 0, %s28
      %s48 = sphi 0, %s48
      %s50 = sphi 0, %s48
      %s51 = sphi 0, %s50
      %s65 = sphi 0, %s51
      %s69 = sphi 0, %s69
      %s71 = sphi 0, %s69
      %s72 = sphi 0, %s71
      %s86 = sphi 0, %s72
      %s90 = sphi 0, %s90
      %s92 = sphi 0, %s90
      %s93 = sphi 0, %s92
      %s107 = sphi 0, %s93
      %s113 = sphi 0, %s115
      %s116 = sphi 0, %s113
      %s117 = sphi 0, %s116
      %s133 = sphi 0, %s117
      %s139 = sphi 0, %s141
      %s142 = sphi 0, %s139
      %s143 = sphi 0, %s142
      %s159 = sphi 0, %s143
    $region4: #{moe_forward.1} parent=1 // loop_header_branch
      %17 = sbr.rel (%p15) target = $region8
    $region5: #{moe_forward.1} parent=1 // loop_body
      %s19 = ssub.s32 %s14, 1
      %s20 = ssub.s32 %s14, 2
      %s21 = sadd.s32 %s14, 1
      %s22 = ssub.s32 %s14, %s21
      %p23 = scmp.eq.s32.totalorder %s22, 0
      %s25 = sadd.s32 %s24, 1
      %s26 = scalar_select %p23, %s24, %s25
      %p29 = pneg %p23
      %p30 = scmp.eq.s32.totalorder %s14, 1
      %p31 = por %p29, %p30
      %p32 = scmp.ne.s32.totalorder %s24, %s27
      %p33 = scmp.eq.s32.totalorder %s14, 0
      %p34 = por %p32, %p33
      %p35 = scmp.ne.s32.totalorder %s24, %s27
      %p36 = scmp.eq.s32.totalorder %s19, 1
      %p37 = por %p35, %p36
      %p38 = scmp.ne.s32.totalorder %s27, %s28
      %p39 = scmp.eq.s32.totalorder %s19, 0
      %p40 = por %p38, %p39
      %p41 = scmp.ne.s32.totalorder %s27, %s28
      %p42 = scmp.eq.s32.totalorder %s20, 1
      %p43 = por %p41, %p42
      %p45 = scmp.ne.s32.totalorder %s28, %s44
      %p46 = scmp.eq.s32.totalorder %s20, 0
      %p47 = por %p45, %p46
      %s49 = sadd.s32 %s48, 1
      %p52 = scmp.eq.s32.totalorder %s14, 1
      %p53 = scmp.ne.s32.totalorder %s48, %s50
      %p54 = scmp.eq.s32.totalorder %s14, 0
      %p55 = por %p53, %p54
      %p56 = scmp.ne.s32.totalorder %s48, %s50
      %p57 = scmp.eq.s32.totalorder %s19, 1
      %p58 = por %p56, %p57
      %p59 = scmp.ne.s32.totalorder %s50, %s51
      %p60 = scmp.eq.s32.totalorder %s19, 0
      %p61 = por %p59, %p60
      %p62 = scmp.ne.s32.totalorder %s50, %s51
      %p63 = scmp.eq.s32.totalorder %s20, 1
      %p64 = por %p62, %p63
      %p66 = scmp.ne.s32.totalorder %s51, %s65
      %p67 = scmp.eq.s32.totalorder %s20, 0
      %p68 = por %p66, %p67
      %s70 = sadd.s32 %s69, 1
      %p73 = scmp.eq.s32.totalorder %s14, 1
      %p74 = scmp.ne.s32.totalorder %s69, %s71
      %p75 = scmp.eq.s32.totalorder %s14, 0
      %p76 = por %p74, %p75
      %p77 = scmp.ne.s32.totalorder %s69, %s71
      %p78 = scmp.eq.s32.totalorder %s19, 1
      %p79 = por %p77, %p78
      %p80 = scmp.ne.s32.totalorder %s71, %s72
      %p81 = scmp.eq.s32.totalorder %s19, 0
      %p82 = por %p80, %p81
      %p83 = scmp.ne.s32.totalorder %s71, %s72
      %p84 = scmp.eq.s32.totalorder %s20, 1
      %p85 = por %p83, %p84
      %p87 = scmp.ne.s32.totalorder %s72, %s86
      %p88 = scmp.eq.s32.totalorder %s20, 0
      %p89 = por %p87, %p88
      %s91 = sadd.s32 %s90, 1
      %p94 = scmp.eq.s32.totalorder %s14, 1
      %p95 = scmp.ne.s32.totalorder %s90, %s92
      %p96 = scmp.eq.s32.totalorder %s14, 0
      %p97 = por %p95, %p96
      %p98 = scmp.ne.s32.totalorder %s90, %s92
      %p99 = scmp.eq.s32.totalorder %s19, 1
      %p100 = por %p98, %p99
      %p101 = scmp.ne.s32.totalorder %s92, %s93
      %p102 = scmp.eq.s32.totalorder %s19, 0
      %p103 = por %p101, %p102
      %p104 = scmp.ne.s32.totalorder %s92, %s93
      %p105 = scmp.eq.s32.totalorder %s20, 1
      %p106 = por %p104, %p105
      %p108 = scmp.ne.s32.totalorder %s93, %s107
      %p109 = scmp.eq.s32.totalorder %s20, 0
      %p110 = por %p108, %p109
      %s111 = ssub.s32 %s14, %s21
      %p112 = scmp.eq.s32.totalorder %s111, 0
      %s114 = sadd.s32 %s113, 1
      %s115 = scalar_select %p112, %s113, %s114
      %p118 = pneg %p112
      %p119 = scmp.eq.s32.totalorder %s14, 1
      %p120 = por %p118, %p119
      %p121 = scmp.ne.s32.totalorder %s113, %s116
      %p122 = scmp.eq.s32.totalorder %s14, 0
      %p123 = por %p121, %p122
      %p124 = scmp.ne.s32.totalorder %s113, %s116
      %p125 = scmp.eq.s32.totalorder %s19, 1
      %p126 = por %p124, %p125
      %p127 = scmp.ne.s32.totalorder %s116, %s117
      %p128 = scmp.eq.s32.totalorder %s19, 0
      %p129 = por %p127, %p128
      %p130 = scmp.ne.s32.totalorder %s116, %s117
      %p131 = scmp.eq.s32.totalorder %s20, 1
      %p132 = por %p130, %p131
      %p134 = scmp.ne.s32.totalorder %s117, %s133
      %p135 = scmp.eq.s32.totalorder %s20, 0
      %p136 = por %p134, %p135
      %s137 = ssub.s32 %s14, %s21
      %p138 = scmp.eq.s32.totalorder %s137, 0
      %s140 = sadd.s32 %s139, 1
      %s141 = scalar_select %p138, %s139, %s140
      %p144 = pneg %p138
      %p145 = scmp.eq.s32.totalorder %s14, 1
      %p146 = por %p144, %p145
      %p147 = scmp.ne.s32.totalorder %s139, %s142
      %p148 = scmp.eq.s32.totalorder %s14, 0
      %p149 = por %p147, %p148
      %p150 = scmp.ne.s32.totalorder %s139, %s142
      %p151 = scmp.eq.s32.totalorder %s19, 1
      %p152 = por %p150, %p151
      %p153 = scmp.ne.s32.totalorder %s142, %s143
      %p154 = scmp.eq.s32.totalorder %s19, 0
      %p155 = por %p153, %p154
      %p156 = scmp.ne.s32.totalorder %s142, %s143
      %p157 = scmp.eq.s32.totalorder %s20, 1
      %p158 = por %p156, %p157
      %p160 = scmp.ne.s32.totalorder %s143, %s159
      %p161 = scmp.eq.s32.totalorder %s20, 0
      %p162 = por %p160, %p161
      %p163 = scmp.le.s32.totalorder 1, %s14
      %p164 = scmp.lt.s32.totalorder %s14, 3
      %p165 = pnand %p163, %p164
      %p166 = pneg %p165
      // Predicated region
      $region9: #{moe_forward.1} parent=5 // pred_check
        _
      $region10: #{moe_forward.1} parent=5 // pred_check_branch
        %168 = sbr.rel (%p165) target = $region12
      $region11: #{moe_forward.1} parent=5 // pred_region
        %s169 = ssub.s32 %s14, 1
        // Predicated region
        $region13: #{moe_forward.1} parent=11 // pred_check
          %p170 = pneg %p61
        $region14: #{moe_forward.1} parent=11 // pred_check_branch
          %172 = sbr.rel (%p170) target = $region16
        $region15: #{moe_forward.1} parent=11 // pred_region
          %s174 = ssub.s32 3584, 3584
          %175 = vsyncadd [#allocation3], %s174
          %s176 = sshll.u32 [#allocation2], 4
          %s177 = int_to_ptr.vmem [resolvable:$true] %s176
          %182 = dma.hbm_to_vmem [thread:$0]  %s1, 3584, %s177, [#allocation3], 896, 896, 56
        $region16: #{moe_forward.1} parent=11 // pred_fallthru
          _
        // Predicated region
        $region17: #{moe_forward.1} parent=11 // pred_check
          %p183 = pneg %p82
        $region18: #{moe_forward.1} parent=11 // pred_check_branch
          %185 = sbr.rel (%p183) target = $region20
        $region19: #{moe_forward.1} parent=11 // pred_region
          _
        $region20: #{moe_forward.1} parent=11 // pred_fallthru
          _
        // Predicated region
        $region21: #{moe_forward.1} parent=11 // pred_check
          %p186 = pneg %p103
        $region22: #{moe_forward.1} parent=11 // pred_check_branch
          %188 = sbr.rel (%p186) target = $region24
        $region23: #{moe_forward.1} parent=11 // pred_region
          %s190 = ssub.s32 14336, 14336
          %191 = vsyncadd [#allocation5], %s190
          %s192 = sshll.u32 [#allocation4], 4
          %s193 = int_to_ptr.vmem [resolvable:$true] %s192
          %198 = dma.hbm_to_vmem [thread:$0]  %s3, 14336, %s193, [#allocation5], 128, 128, 8
        $region24: #{moe_forward.1} parent=11 // pred_fallthru
          _
      $region12: #{moe_forward.1} parent=5 // pred_fallthru
        _
      %p199 = scmp.lt.s32.totalorder %s14, 2
      // Predicated region
      $region25: #{moe_forward.1} parent=5 // pred_check
        %p200 = pneg %p199
      $region26: #{moe_forward.1} parent=5 // pred_check_branch
        %202 = sbr.rel (%p200) target = $region28
      $region27: #{moe_forward.1} parent=5 // pred_region
        // Predicated region
        $region29: #{moe_forward.1} parent=27 // pred_check
          %p203 = pneg %p34
        $region30: #{moe_forward.1} parent=27 // pred_check_branch
          %205 = sbr.rel (%p203) target = $region32
        $region31: #{moe_forward.1} parent=27 // pred_region
          %p206 = scmp.lt.s32.totalorder %s14, 1
          %s207 = scalar_select %p206, %s14, 1
          %s208 = smul.addr %s207, 8
          %s209 = scalar_lea.vmem %s0, %s208
        $region32: #{moe_forward.1} parent=27 // pred_fallthru
          _
      $region28: #{moe_forward.1} parent=5 // pred_fallthru
        _
      %p210 = scmp.le.s32.totalorder 1, %s14
      %p211 = scmp.lt.s32.totalorder %s14, 3
      %p212 = pnand %p210, %p211
      %p213 = pneg %p212
      // Predicated region
      $region33: #{moe_forward.1} parent=5 // pred_check
        _
      $region34: #{moe_forward.1} parent=5 // pred_check_branch
        %215 = sbr.rel (%p212) target = $region36
      $region35: #{moe_forward.1} parent=5 // pred_region
        %s216 = ssub.s32 %s14, 1
        // Predicated region
        $region37: #{moe_forward.1} parent=35 // pred_check
          %p217 = pneg %p61
        $region38: #{moe_forward.1} parent=35 // pred_check_branch
          %219 = sbr.rel (%p217) target = $region40
        $region39: #{moe_forward.1} parent=35 // pred_region
          %220 = dma.done [#allocation3], 3584
        $region40: #{moe_forward.1} parent=35 // pred_fallthru
          _
        // Predicated region
        $region41: #{moe_forward.1} parent=35 // pred_check
          %p221 = pneg %p103
        $region42: #{moe_forward.1} parent=35 // pred_check_branch
          %223 = sbr.rel (%p221) target = $region44
        $region43: #{moe_forward.1} parent=35 // pred_region
          %224 = dma.done [#allocation5], 14336
        $region44: #{moe_forward.1} parent=35 // pred_fallthru
          _
        %p225 = scmp.lt.s32.totalorder %s19, 1
        %s226 = scalar_select %p225, %s19, 1
        %s227 = smul.addr %s226, 8
        %s228 = scalar_lea.vmem %s0, %s227
        %p229 = pneg %p40
        %p230 = pneg %p37
        %p231 = pneg %p61
        %p232 = pneg %p58
        %p233 = pneg %p82
        %p234 = pneg %p79
        %p235 = pneg %p103
        %p236 = pneg %p100
        %p237 = pneg %p129
        %p238 = pneg %p126
        %p239 = scmp.lt.s32.totalorder %s19, 1
        %s240 = scalar_select %p239, %s19, 1
        %s241 = smul.addr %s240, 8
        %s242 = scalar_lea.vmem %s4, %s241
        %p243 = pneg %p155
        %p244 = pneg %p152
        %p245 = scmp.lt.s32.totalorder %s19, 1
        %s246 = scalar_select %p245, %s19, 1
        %s247 = smul.addr %s246, 8
        %s248 = scalar_lea.vmem %s5, %s247
        %p249 = scmp.lt.s32.totalorder %s19, 1
        %s250 = scalar_select %p249, %s19, 1
        %s251 = smul.addr %s250, 8
        %s252 = scalar_lea.vmem %s0, %s251
        %p253 = scmp.lt.s32.totalorder %s19, 1
        %s254 = scalar_select %p253, %s19, 1
        %s255 = smul.addr %s254, 8
        %s256 = scalar_lea.vmem %s4, %s255
        %p257 = scmp.lt.s32.totalorder %s19, 1
        %s258 = scalar_select %p257, %s19, 1
        %s259 = smul.addr %s258, 8
        %s260 = scalar_lea.vmem %s5, %s259
        %v261 = vld [vmem:[%s252] sm:$0xff]
        %v262 = vld [vmem:[#allocation2] sm:$0xff]
        %v263 = vld [vmem:[#allocation2 + $0x8] sm:$0xff]
        %v264 = vld [vmem:[#allocation2 + $0x10] sm:$0xff]
        %v265 = vld [vmem:[#allocation2 + $0x18] sm:$0xff]
        %v266 = vld [vmem:[#allocation2 + $0x20] sm:$0xff]
        %v267 = vld [vmem:[#allocation2 + $0x28] sm:$0xff]
        %v268 = vld [vmem:[#allocation2 + $0x30] sm:$0xff]
        %v269 = vld [vmem:[#allocation2 + $0x38] sm:$0xff]
        %v270 = vld [vmem:[#allocation2 + $0x40] sm:$0xff]
        %v271 = vld [vmem:[#allocation2 + $0x48] sm:$0xff]
        %v272 = vld [vmem:[#allocation2 + $0x50] sm:$0xff]
        %v273 = vld [vmem:[#allocation2 + $0x58] sm:$0xff]
        %v274 = vld [vmem:[#allocation2 + $0x60] sm:$0xff]
        %v275 = vld [vmem:[#allocation2 + $0x68] sm:$0xff]
        %v276 = vld [vmem:[#allocation2 + $0x70] sm:$0xff]
        %v277 = vld [vmem:[#allocation2 + $0x78] sm:$0xff]
        %v278 = vld [vmem:[#allocation2 + $0x80] sm:$0xff]
        %v279 = vld [vmem:[#allocation2 + $0x88] sm:$0xff]
        %v280 = vld [vmem:[#allocation2 + $0x90] sm:$0xff]
        %v281 = vld [vmem:[#allocation2 + $0x98] sm:$0xff]
        %v282 = vld [vmem:[#allocation2 + $0xa0] sm:$0xff]
        %v283 = vld [vmem:[#allocation2 + $0xa8] sm:$0xff]
        %v284 = vld [vmem:[#allocation2 + $0xb0] sm:$0xff]
        %v285 = vld [vmem:[#allocation2 + $0xb8] sm:$0xff]
        %v286 = vld [vmem:[#allocation2 + $0xc0] sm:$0xff]
        %v287 = vld [vmem:[#allocation2 + $0xc8] sm:$0xff]
        %v288 = vld [vmem:[#allocation2 + $0xd0] sm:$0xff]
        %v289 = vld [vmem:[#allocation2 + $0xd8] sm:$0xff]
        %v290 = vld [vmem:[%s2] sm:$0xff]
        %v292 = vlaneseq
        %v293 = vshrl.u32 %v292, 7
        %v294 = vsub.s32 0, %v293
        %v295 = vrot.slane %v290, %v294
        %v296 = vlaneseq
        %v297 = vshrl.u32 %v296, 7
        %v298 = vsub.s32 1, %v297
        %v299 = vrot.slane %v290, %v298
        %v300 = vlaneseq
        %v301 = vshrl.u32 %v300, 7
        %v302 = vsub.s32 2, %v301
        %v303 = vrot.slane %v290, %v302
        %v304 = vlaneseq
        %v305 = vshrl.u32 %v304, 7
        %v306 = vsub.s32 3, %v305
        %v307 = vrot.slane %v290, %v306
        %v308 = vlaneseq
        %v309 = vshrl.u32 %v308, 7
        %v310 = vsub.s32 4, %v309
        %v311 = vrot.slane %v290, %v310
        %v312 = vlaneseq
        %v313 = vshrl.u32 %v312, 7
        %v314 = vsub.s32 5, %v313
        %v315 = vrot.slane %v290, %v314
        %v316 = vlaneseq
        %v317 = vshrl.u32 %v316, 7
        %v318 = vsub.s32 6, %v317
        %v319 = vrot.slane %v290, %v318
        %vm327 = vcmask 261120
        %v329 = vsel %vm327, %v261, 0
        %331 = vmatprep.subr.mxu0 0.0
        %332 = vmatpush1.msra.mxu0 0.0
        %333 = vmatprep.subr.mxu0 0.0
        %334 = vmatpush1.msra.mxu0 0.0
        %335 = vmatprep.subr.mxu0 0.0
        %336 = vmatpush1.msra.mxu0 0.0
        %337 = vmatprep.subr.mxu0 0.0
        %338 = vmatpush1.msra.mxu0 0.0
        %339 = vmatprep.subr.mxu0 0.0
        %340 = vmatpush1.msra.mxu0 0.0
        %341 = vmatprep.subr.mxu0 0.0
        %342 = vmatpush1.msra.mxu0 0.0
        %343 = vmatprep.subr.mxu0 0.0
        %344 = vmatpush1.msra.mxu0 0.0
        %345 = vmatprep.subr.mxu0 0.0
        %346 = vmatpush1.msra.mxu0 0.0
        %347 = vmatprep.subr.mxu0 0.0
        %348 = vmatpush1.msra.mxu0 0.0
        %349 = vmatprep.subr.mxu0 0.0
        %350 = vmatpush1.msra.mxu0 0.0
        %351 = vmatprep.subr.mxu0 0.0
        %352 = vmatpush1.msra.mxu0 0.0
        %353 = vmatprep.subr.mxu0 0.0
        %354 = vmatpush1.msra.mxu0 0.0
        %355 = vmatprep.subr.mxu0 %v284
        %356 = vmatpush1.msra.mxu0 %v283
        %357 = vmatprep.subr.mxu0 %v277
        %358 = vmatpush1.msra.mxu0 %v276
        %359 = vmatprep.subr.mxu0 %v270
        %360 = vmatpush1.msra.mxu0 %v269
        %361 = vmatprep.subr.mxu0 %v263
        %362 = vmatpush1.msra.mxu0 %v262
        %363 = vmatprep.subr.mxu0 0.0
        %364 = vmatpush2.msra.mxu0 0.0
        %365 = vmatprep.subr.mxu0 0.0
        %366 = vmatpush2.msra.mxu0 0.0
        %367 = vmatprep.subr.mxu0 0.0
        %368 = vmatpush2.msra.mxu0 0.0
        %369 = vmatprep.subr.mxu0 0.0
        %370 = vmatpush2.msra.mxu0 0.0
        %371 = vmatprep.subr.mxu0 0.0
        %372 = vmatpush2.msra.mxu0 0.0
        %373 = vmatprep.subr.mxu0 0.0
        %374 = vmatpush2.msra.mxu0 0.0
        %375 = vmatprep.subr.mxu0 0.0
        %376 = vmatpush2.msra.mxu0 0.0
        %377 = vmatprep.subr.mxu0 0.0
        %378 = vmatpush2.msra.mxu0 0.0
        %379 = vmatprep.subr.mxu0 0.0
        %380 = vmatpush2.msra.mxu0 0.0
        %381 = vmatprep.subr.mxu0 0.0
        %382 = vmatpush2.msra.mxu0 0.0
        %383 = vmatprep.subr.mxu0 0.0
        %384 = vmatpush2.msra.mxu0 0.0
        %385 = vmatprep.subr.mxu0 0.0
        %386 = vmatpush2.msra.mxu0 0.0
        %387 = vmatprep.subr.mxu0 0.0
        %388 = vmatpush2.msra.mxu0 0.0
        %389 = vmatprep.subr.mxu0 0.0
        %390 = vmatpush2.msra.mxu0 0.0
        %391 = vmatprep.subr.mxu0 0.0
        %392 = vmatpush2.msra.mxu0 0.0
        %393 = vmatprep.subr.mxu0 0.0
        %394 = vmatpush2.msra.mxu0 0.0
        %395 = vmatprep.mubr.f32.mxu0 0.0
        %396 = vmatmul.mubr.f32.gmra.mxu0 %v329
        %v397 = vpop.f32.mrf.mxu0
        %v398 = vadd.f32 %v295, %v397
        %v399 = vpop.f32.mrf.mxu0
        %v400 = vadd.f32 %v299, %v399
        %401 = vdwg.mxu0
        %402 = vmatprep.subr.mxu0 0.0
        %403 = vmatpush1.msra.mxu0 0.0
        %404 = vmatprep.subr.mxu0 0.0
        %405 = vmatpush1.msra.mxu0 0.0
        %406 = vmatprep.subr.mxu0 0.0
        %407 = vmatpush1.msra.mxu0 0.0
        %408 = vmatprep.subr.mxu0 0.0
        %409 = vmatpush1.msra.mxu0 0.0
        %410 = vmatprep.subr.mxu0 0.0
        %411 = vmatpush1.msra.mxu0 0.0
        %412 = vmatprep.subr.mxu0 0.0
        %413 = vmatpush1.msra.mxu0 0.0
        %414 = vmatprep.subr.mxu0 0.0
        %415 = vmatpush1.msra.mxu0 0.0
        %416 = vmatprep.subr.mxu0 0.0
        %417 = vmatpush1.msra.mxu0 0.0
        %418 = vmatprep.subr.mxu0 0.0
        %419 = vmatpush1.msra.mxu0 0.0
        %420 = vmatprep.subr.mxu0 0.0
        %421 = vmatpush1.msra.mxu0 0.0
        %422 = vmatprep.subr.mxu0 0.0
        %423 = vmatpush1.msra.mxu0 0.0
        %424 = vmatprep.subr.mxu0 0.0
        %425 = vmatpush1.msra.mxu0 0.0
        %426 = vmatprep.subr.mxu0 %v286
        %427 = vmatpush1.msra.mxu0 %v285
        %428 = vmatprep.subr.mxu0 %v279
        %429 = vmatpush1.msra.mxu0 %v278
        %430 = vmatprep.subr.mxu0 %v272
        %431 = vmatpush1.msra.mxu0 %v271
        %432 = vmatprep.subr.mxu0 %v265
        %433 = vmatpush1.msra.mxu0 %v264
        %434 = vmatprep.subr.mxu0 0.0
        %435 = vmatpush2.msra.mxu0 0.0
        %436 = vmatprep.subr.mxu0 0.0
        %437 = vmatpush2.msra.mxu0 0.0
        %438 = vmatprep.subr.mxu0 0.0
        %439 = vmatpush2.msra.mxu0 0.0
        %440 = vmatprep.subr.mxu0 0.0
        %441 = vmatpush2.msra.mxu0 0.0
        %442 = vmatprep.subr.mxu0 0.0
        %443 = vmatpush2.msra.mxu0 0.0
        %444 = vmatprep.subr.mxu0 0.0
        %445 = vmatpush2.msra.mxu0 0.0
        %446 = vmatprep.subr.mxu0 0.0
        %447 = vmatpush2.msra.mxu0 0.0
        %448 = vmatprep.subr.mxu0 0.0
        %449 = vmatpush2.msra.mxu0 0.0
        %450 = vmatprep.subr.mxu0 0.0
        %451 = vmatpush2.msra.mxu0 0.0
        %452 = vmatprep.subr.mxu0 0.0
        %453 = vmatpush2.msra.mxu0 0.0
        %454 = vmatprep.subr.mxu0 0.0
        %455 = vmatpush2.msra.mxu0 0.0
        %456 = vmatprep.subr.mxu0 0.0
        %457 = vmatpush2.msra.mxu0 0.0
        %458 = vmatprep.subr.mxu0 0.0
        %459 = vmatpush2.msra.mxu0 0.0
        %460 = vmatprep.subr.mxu0 0.0
        %461 = vmatpush2.msra.mxu0 0.0
        %462 = vmatprep.subr.mxu0 0.0
        %463 = vmatpush2.msra.mxu0 0.0
        %464 = vmatprep.subr.mxu0 0.0
        %465 = vmatpush2.msra.mxu0 0.0
        %466 = vmatprep.mubr.f32.mxu0 0.0
        %467 = vmatmul.mubr.f32.gmra.mxu0 %v329
        %v468 = vpop.f32.mrf.mxu0
        %v469 = vadd.f32 %v303, %v468
        %v470 = vpop.f32.mrf.mxu0
        %v471 = vadd.f32 %v307, %v470
        %472 = vdwg.mxu0
        %473 = vmatprep.subr.mxu0 0.0
        %474 = vmatpush1.msra.mxu0 0.0
        %475 = vmatprep.subr.mxu0 0.0
        %476 = vmatpush1.msra.mxu0 0.0
        %477 = vmatprep.subr.mxu0 0.0
        %478 = vmatpush1.msra.mxu0 0.0
        %479 = vmatprep.subr.mxu0 0.0
        %480 = vmatpush1.msra.mxu0 0.0
        %481 = vmatprep.subr.mxu0 0.0
        %482 = vmatpush1.msra.mxu0 0.0
        %483 = vmatprep.subr.mxu0 0.0
        %484 = vmatpush1.msra.mxu0 0.0
        %485 = vmatprep.subr.mxu0 0.0
        %486 = vmatpush1.msra.mxu0 0.0
        %487 = vmatprep.subr.mxu0 0.0
        %488 = vmatpush1.msra.mxu0 0.0
        %489 = vmatprep.subr.mxu0 0.0
        %490 = vmatpush1.msra.mxu0 0.0
        %491 = vmatprep.subr.mxu0 0.0
        %492 = vmatpush1.msra.mxu0 0.0
        %493 = vmatprep.subr.mxu0 0.0
        %494 = vmatpush1.msra.mxu0 0.0
        %495 = vmatprep.subr.mxu0 0.0
        %496 = vmatpush1.msra.mxu0 0.0
        %497 = vmatprep.subr.mxu0 %v288
        %498 = vmatpush1.msra.mxu0 %v287
        %499 = vmatprep.subr.mxu0 %v281
        %500 = vmatpush1.msra.mxu0 %v280
        %501 = vmatprep.subr.mxu0 %v274
        %502 = vmatpush1.msra.mxu0 %v273
        %503 = vmatprep.subr.mxu0 %v267
        %504 = vmatpush1.msra.mxu0 %v266
        %505 = vmatprep.subr.mxu0 0.0
        %506 = vmatpush2.msra.mxu0 0.0
        %507 = vmatprep.subr.mxu0 0.0
        %508 = vmatpush2.msra.mxu0 0.0
        %509 = vmatprep.subr.mxu0 0.0
        %510 = vmatpush2.msra.mxu0 0.0
        %511 = vmatprep.subr.mxu0 0.0
        %512 = vmatpush2.msra.mxu0 0.0
        %513 = vmatprep.subr.mxu0 0.0
        %514 = vmatpush2.msra.mxu0 0.0
        %515 = vmatprep.subr.mxu0 0.0
        %516 = vmatpush2.msra.mxu0 0.0
        %517 = vmatprep.subr.mxu0 0.0
        %518 = vmatpush2.msra.mxu0 0.0
        %519 = vmatprep.subr.mxu0 0.0
        %520 = vmatpush2.msra.mxu0 0.0
        %521 = vmatprep.subr.mxu0 0.0
        %522 = vmatpush2.msra.mxu0 0.0
        %523 = vmatprep.subr.mxu0 0.0
        %524 = vmatpush2.msra.mxu0 0.0
        %525 = vmatprep.subr.mxu0 0.0
        %526 = vmatpush2.msra.mxu0 0.0
        %527 = vmatprep.subr.mxu0 0.0
        %528 = vmatpush2.msra.mxu0 0.0
        %529 = vmatprep.subr.mxu0 0.0
        %530 = vmatpush2.msra.mxu0 0.0
        %531 = vmatprep.subr.mxu0 0.0
        %532 = vmatpush2.msra.mxu0 0.0
        %533 = vmatprep.subr.mxu0 0.0
        %534 = vmatpush2.msra.mxu0 0.0
        %535 = vmatprep.subr.mxu0 0.0
        %536 = vmatpush2.msra.mxu0 0.0
        %537 = vmatprep.mubr.f32.mxu0 0.0
        %538 = vmatmul.mubr.f32.gmra.mxu0 %v329
        %v539 = vpop.f32.mrf.mxu0
        %v540 = vadd.f32 %v311, %v539
        %v541 = vpop.f32.mrf.mxu0
        %v542 = vadd.f32 %v315, %v541
        %543 = vdwg.mxu0
        %544 = vmatprep.subr.mxu0 0.0
        %545 = vmatpush1.msra.mxu0 0.0
        %546 = vmatprep.subr.mxu0 0.0
        %547 = vmatpush1.msra.mxu0 0.0
        %548 = vmatprep.subr.mxu0 0.0
        %549 = vmatpush1.msra.mxu0 0.0
        %550 = vmatprep.subr.mxu0 0.0
        %551 = vmatpush1.msra.mxu0 0.0
        %552 = vmatprep.subr.mxu0 0.0
        %553 = vmatpush1.msra.mxu0 0.0
        %554 = vmatprep.subr.mxu0 0.0
        %555 = vmatpush1.msra.mxu0 0.0
        %556 = vmatprep.subr.mxu0 0.0
        %557 = vmatpush1.msra.mxu0 0.0
        %558 = vmatprep.subr.mxu0 0.0
        %559 = vmatpush1.msra.mxu0 0.0
        %560 = vmatprep.subr.mxu0 0.0
        %561 = vmatpush1.msra.mxu0 0.0
        %562 = vmatprep.subr.mxu0 0.0
        %563 = vmatpush1.msra.mxu0 0.0
        %564 = vmatprep.subr.mxu0 0.0
        %565 = vmatpush1.msra.mxu0 0.0
        %566 = vmatprep.subr.mxu0 0.0
        %567 = vmatpush1.msra.mxu0 0.0
        %568 = vmatprep.subr.mxu0 0.0
        %569 = vmatpush1.msra.mxu0 %v289
        %570 = vmatprep.subr.mxu0 0.0
        %571 = vmatpush1.msra.mxu0 %v282
        %572 = vmatprep.subr.mxu0 0.0
        %573 = vmatpush1.msra.mxu0 %v275
        %574 = vmatprep.subr.mxu0 0.0
        %575 = vmatpush1.msra.mxu0 %v268
        %576 = vmatprep.subr.mxu0 0.0
        %577 = vmatpush2.msra.mxu0 0.0
        %578 = vmatprep.subr.mxu0 0.0
        %579 = vmatpush2.msra.mxu0 0.0
        %580 = vmatprep.subr.mxu0 0.0
        %581 = vmatpush2.msra.mxu0 0.0
        %582 = vmatprep.subr.mxu0 0.0
        %583 = vmatpush2.msra.mxu0 0.0
        %584 = vmatprep.subr.mxu0 0.0
        %585 = vmatpush2.msra.mxu0 0.0
        %586 = vmatprep.subr.mxu0 0.0
        %587 = vmatpush2.msra.mxu0 0.0
        %588 = vmatprep.subr.mxu0 0.0
        %589 = vmatpush2.msra.mxu0 0.0
        %590 = vmatprep.subr.mxu0 0.0
        %591 = vmatpush2.msra.mxu0 0.0
        %592 = vmatprep.subr.mxu0 0.0
        %593 = vmatpush2.msra.mxu0 0.0
        %594 = vmatprep.subr.mxu0 0.0
        %595 = vmatpush2.msra.mxu0 0.0
        %596 = vmatprep.subr.mxu0 0.0
        %597 = vmatpush2.msra.mxu0 0.0
        %598 = vmatprep.subr.mxu0 0.0
        %599 = vmatpush2.msra.mxu0 0.0
        %600 = vmatprep.subr.mxu0 0.0
        %601 = vmatpush2.msra.mxu0 0.0
        %602 = vmatprep.subr.mxu0 0.0
        %603 = vmatpush2.msra.mxu0 0.0
        %604 = vmatprep.subr.mxu0 0.0
        %605 = vmatpush2.msra.mxu0 0.0
        %606 = vmatprep.subr.mxu0 0.0
        %607 = vmatpush2.msra.mxu0 0.0
        %608 = vmatprep.mubr.f32.mxu0 0.0
        %609 = vmatmul.mubr.f32.gmra.mxu0 %v329
        %v610 = vpop.f32.mrf.mxu0
        %v611 = vadd.f32 %v319, %v610
        %v612 = vpop.f32.mrf.mxu0
        %613 = vdwg.mxu0
        %v614 = vmax.f32 %v400, 0.0
        %v615 = vmax.f32 %v469, 0.0
        %v616 = vmax.f32 %v471, 0.0
        %v617 = vmax.f32 %v540, 0.0
        %v618 = vmax.f32 %v542, 0.0
        %v619 = vmax.f32 %v611, 0.0
        %620 = vmax.xlane.f32.xlu0 %v398
        %v621 = vpop.xlane.xlu0 %620
        %v622 = vsub.f32 %v398, %v621
        %v623 = vmul.f32 %v622, 1.442695
        %v624 = vpow.pop %v623
        %625 = vadd.xlane.f32.xlu0 %v624
        %v626 = vpop.xlane.xlu0 %625
        %v627 = vrcp.pop %v626
        %v628 = vmul.f32 %v624, %v627
        %629 = vst [vmem:[%s260] sm:$0xff] %v628
        %v630 = vlaneseq
        %v631 = vand.u32 %v630, 127
        %632 = vmax.xlane.f32.xlu0 %v628
        %v633 = vpop.xlane.xlu0 %632
        %vm634 = vcmp.eq.f32.partialorder %v628, %v633
        %v635 = vsel %vm634, %v631, 128
        %v636 = vand.u32 %v635, 65535
        %v637 = vshra.s32 %v635, 16
        %v638 = vcvt.s32.f32 %v636
        %v639 = vcvt.s32.f32 %v637
        %640 = vmin.xlane.f32.xlu0 %v639
        %v641 = vpop.xlane.xlu0 %640
        %vm642 = vcmp.eq.f32.partialorder %v639, %v641
        %v643 = vsel %vm642, %v638, inf
        %644 = vmin.xlane.f32.xlu0 %v643
        %v645 = vpop.xlane.xlu0 %644
        %v646 = vcvt.f32.s32 %v645
        %v647 = vcvt.f32.s32 %v641
        %v648 = vshll.u32 %v647, 16
        %v649 = vadd.s32 %v648, %v646
        %vm650 = vcmp.eq.s32.totalorder %v631, %v649
        %v651 = vsel %vm650, -1.0, %v628
        %652 = vmax.xlane.f32.xlu0 %v651
        %v653 = vpop.xlane.xlu0 %652
        %vm654 = vcmp.eq.f32.partialorder %v651, %v653
        %v655 = vsel %vm654, %v631, 128
        %v656 = vand.u32 %v655, 65535
        %v657 = vshra.s32 %v655, 16
        %v658 = vcvt.s32.f32 %v656
        %v659 = vcvt.s32.f32 %v657
        %660 = vmin.xlane.f32.xlu0 %v659
        %v661 = vpop.xlane.xlu0 %660
        %vm662 = vcmp.eq.f32.partialorder %v659, %v661
        %v663 = vsel %vm662, %v658, inf
        %664 = vmin.xlane.f32.xlu0 %v663
        %v665 = vpop.xlane.xlu0 %664
        %v666 = vcvt.f32.s32 %v665
        %v667 = vcvt.f32.s32 %v661
        %v668 = vshll.u32 %v667, 16
        %v669 = vadd.s32 %v668, %v666
        %vm670 = vcmp.eq.s32.totalorder %v631, %v669
        %vm671 = vmor %vm650, %vm670
        %vm672 = vcmp.lt.s32.totalorder %v631, 2
        %v673 = vsel %vm671, %v628, 0.0
        %v674 = vsel %vm672, 0.5, %v673
        %676 = vset.pattern.permute.xlu0 0
        %677 = vperm.xlu0 %676, %v674
        %v678 = vpop.permute.xlu0 %677
        %680 = vset.pattern.permute.xlu0 1
        %681 = vperm.xlu0 %680, %v674
        %v682 = vpop.permute.xlu0 %681
        %684 = vset.pattern.permute.xlu0 2
        %685 = vperm.xlu0 %684, %v674
        %v686 = vpop.permute.xlu0 %685
        %688 = vset.pattern.permute.xlu0 3
        %689 = vperm.xlu0 %688, %v674
        %v690 = vpop.permute.xlu0 %689
        %692 = vset.pattern.permute.xlu0 4
        %693 = vperm.xlu0 %692, %v674
        %v694 = vpop.permute.xlu0 %693
        %696 = vset.pattern.permute.xlu0 5
        %697 = vperm.xlu0 %696, %v674
        %v698 = vpop.permute.xlu0 %697
        %v700 = vmul.f32 %v614, %v678
        %v701 = vmul.f32 %v615, %v682
        %v702 = vmul.f32 %v616, %v686
        %v703 = vmul.f32 %v617, %v690
        %v704 = vmul.f32 %v618, %v694
        %v705 = vmul.f32 %v619, %v698
        %v706 = vld [vmem:[#allocation4] sm:$0xff]
        %v707 = vld [vmem:[#allocation4 + $0x8] sm:$0xff]
        %v708 = vld [vmem:[#allocation4 + $0x10] sm:$0xff]
        %v709 = vld [vmem:[#allocation4 + $0x18] sm:$0xff]
        %v710 = vld [vmem:[#allocation4 + $0x20] sm:$0xff]
        %v711 = vld [vmem:[#allocation4 + $0x28] sm:$0xff]
        %v712 = vld [vmem:[#allocation4 + $0x30] sm:$0xff]
        %v713 = vld [vmem:[#allocation4 + $0x38] sm:$0xff]
        %v714 = vld [vmem:[#allocation4 + $0x40] sm:$0xff]
        %v715 = vld [vmem:[#allocation4 + $0x48] sm:$0xff]
        %v716 = vld [vmem:[#allocation4 + $0x50] sm:$0xff]
        %v717 = vld [vmem:[#allocation4 + $0x58] sm:$0xff]
        %v718 = vld [vmem:[#allocation4 + $0x60] sm:$0xff]
        %v719 = vld [vmem:[#allocation4 + $0x68] sm:$0xff]
        %v720 = vld [vmem:[#allocation4 + $0x70] sm:$0xff]
        %v721 = vld [vmem:[#allocation4 + $0x78] sm:$0xff]
        %v722 = vld [vmem:[#allocation4 + $0x80] sm:$0xff]
        %v723 = vld [vmem:[#allocation4 + $0x88] sm:$0xff]
        %v724 = vld [vmem:[#allocation4 + $0x90] sm:$0xff]
        %v725 = vld [vmem:[#allocation4 + $0x98] sm:$0xff]
        %v726 = vld [vmem:[#allocation4 + $0xa0] sm:$0xff]
        %v727 = vld [vmem:[#allocation4 + $0xa8] sm:$0xff]
        %v728 = vld [vmem:[#allocation4 + $0xb0] sm:$0xff]
        %v729 = vld [vmem:[#allocation4 + $0xb8] sm:$0xff]
        %v730 = vld [vmem:[#allocation4 + $0xc0] sm:$0xff]
        %v731 = vld [vmem:[#allocation4 + $0xc8] sm:$0xff]
        %v732 = vld [vmem:[#allocation4 + $0xd0] sm:$0xff]
        %v733 = vld [vmem:[#allocation4 + $0xd8] sm:$0xff]
        %v734 = vld [vmem:[#allocation4 + $0xe0] sm:$0xff]
        %v735 = vld [vmem:[#allocation4 + $0xe8] sm:$0xff]
        %v736 = vld [vmem:[#allocation4 + $0xf0] sm:$0xff]
        %v737 = vld [vmem:[#allocation4 + $0xf8] sm:$0xff]
        %v738 = vld [vmem:[#allocation4 + $0x100] sm:$0xff]
        %v739 = vld [vmem:[#allocation4 + $0x108] sm:$0xff]
        %v740 = vld [vmem:[#allocation4 + $0x110] sm:$0xff]
        %v741 = vld [vmem:[#allocation4 + $0x118] sm:$0xff]
        %v742 = vld [vmem:[#allocation4 + $0x120] sm:$0xff]
        %v743 = vld [vmem:[#allocation4 + $0x128] sm:$0xff]
        %v744 = vld [vmem:[#allocation4 + $0x130] sm:$0xff]
        %v745 = vld [vmem:[#allocation4 + $0x138] sm:$0xff]
        %v746 = vld [vmem:[#allocation4 + $0x140] sm:$0xff]
        %v747 = vld [vmem:[#allocation4 + $0x148] sm:$0xff]
        %v748 = vld [vmem:[#allocation4 + $0x150] sm:$0xff]
        %v749 = vld [vmem:[#allocation4 + $0x158] sm:$0xff]
        %v750 = vld [vmem:[#allocation4 + $0x160] sm:$0xff]
        %v751 = vld [vmem:[#allocation4 + $0x168] sm:$0xff]
        %v752 = vld [vmem:[#allocation4 + $0x170] sm:$0xff]
        %v753 = vld [vmem:[#allocation4 + $0x178] sm:$0xff]
        %v754 = vld [vmem:[#allocation4 + $0x180] sm:$0xff]
        %v755 = vld [vmem:[#allocation4 + $0x188] sm:$0xff]
        %v756 = vld [vmem:[#allocation4 + $0x190] sm:$0xff]
        %v757 = vld [vmem:[#allocation4 + $0x198] sm:$0xff]
        %v758 = vld [vmem:[#allocation4 + $0x1a0] sm:$0xff]
        %v759 = vld [vmem:[#allocation4 + $0x1a8] sm:$0xff]
        %v760 = vld [vmem:[#allocation4 + $0x1b0] sm:$0xff]
        %v761 = vld [vmem:[#allocation4 + $0x1b8] sm:$0xff]
        %v762 = vld [vmem:[#allocation4 + $0x1c0] sm:$0xff]
        %v763 = vld [vmem:[#allocation4 + $0x1c8] sm:$0xff]
        %v764 = vld [vmem:[#allocation4 + $0x1d0] sm:$0xff]
        %v765 = vld [vmem:[#allocation4 + $0x1d8] sm:$0xff]
        %v766 = vld [vmem:[#allocation4 + $0x1e0] sm:$0xff]
        %v767 = vld [vmem:[#allocation4 + $0x1e8] sm:$0xff]
        %v768 = vld [vmem:[#allocation4 + $0x1f0] sm:$0xff]
        %v769 = vld [vmem:[#allocation4 + $0x1f8] sm:$0xff]
        %v770 = vld [vmem:[#allocation4 + $0x200] sm:$0xff]
        %v771 = vld [vmem:[#allocation4 + $0x208] sm:$0xff]
        %v772 = vld [vmem:[#allocation4 + $0x210] sm:$0xff]
        %v773 = vld [vmem:[#allocation4 + $0x218] sm:$0xff]
        %v774 = vld [vmem:[#allocation4 + $0x220] sm:$0xff]
        %v775 = vld [vmem:[#allocation4 + $0x228] sm:$0xff]
        %v776 = vld [vmem:[#allocation4 + $0x230] sm:$0xff]
        %v777 = vld [vmem:[#allocation4 + $0x238] sm:$0xff]
        %v778 = vld [vmem:[#allocation4 + $0x240] sm:$0xff]
        %v779 = vld [vmem:[#allocation4 + $0x248] sm:$0xff]
        %v780 = vld [vmem:[#allocation4 + $0x250] sm:$0xff]
        %v781 = vld [vmem:[#allocation4 + $0x258] sm:$0xff]
        %v782 = vld [vmem:[#allocation4 + $0x260] sm:$0xff]
        %v783 = vld [vmem:[#allocation4 + $0x268] sm:$0xff]
        %v784 = vld [vmem:[#allocation4 + $0x270] sm:$0xff]
        %v785 = vld [vmem:[#allocation4 + $0x278] sm:$0xff]
        %v786 = vld [vmem:[#allocation4 + $0x280] sm:$0xff]
        %v787 = vld [vmem:[#allocation4 + $0x288] sm:$0xff]
        %v788 = vld [vmem:[#allocation4 + $0x290] sm:$0xff]
        %v789 = vld [vmem:[#allocation4 + $0x298] sm:$0xff]
        %v790 = vld [vmem:[#allocation4 + $0x2a0] sm:$0xff]
        %v791 = vld [vmem:[#allocation4 + $0x2a8] sm:$0xff]
        %v792 = vld [vmem:[#allocation4 + $0x2b0] sm:$0xff]
        %v793 = vld [vmem:[#allocation4 + $0x2b8] sm:$0xff]
        %v794 = vld [vmem:[#allocation4 + $0x2c0] sm:$0xff]
        %v795 = vld [vmem:[#allocation4 + $0x2c8] sm:$0xff]
        %v796 = vld [vmem:[#allocation4 + $0x2d0] sm:$0xff]
        %v797 = vld [vmem:[#allocation4 + $0x2d8] sm:$0xff]
        %v798 = vld [vmem:[#allocation4 + $0x2e0] sm:$0xff]
        %v799 = vld [vmem:[#allocation4 + $0x2e8] sm:$0xff]
        %v800 = vld [vmem:[#allocation4 + $0x2f0] sm:$0xff]
        %v801 = vld [vmem:[#allocation4 + $0x2f8] sm:$0xff]
        %v802 = vld [vmem:[#allocation4 + $0x300] sm:$0xff]
        %v803 = vld [vmem:[#allocation4 + $0x308] sm:$0xff]
        %v804 = vld [vmem:[#allocation4 + $0x310] sm:$0xff]
        %v805 = vld [vmem:[#allocation4 + $0x318] sm:$0xff]
        %v806 = vld [vmem:[#allocation4 + $0x320] sm:$0xff]
        %v807 = vld [vmem:[#allocation4 + $0x328] sm:$0xff]
        %v808 = vld [vmem:[#allocation4 + $0x330] sm:$0xff]
        %v809 = vld [vmem:[#allocation4 + $0x338] sm:$0xff]
        %v810 = vld [vmem:[#allocation4 + $0x340] sm:$0xff]
        %v811 = vld [vmem:[#allocation4 + $0x348] sm:$0xff]
        %v812 = vld [vmem:[#allocation4 + $0x350] sm:$0xff]
        %v813 = vld [vmem:[#allocation4 + $0x358] sm:$0xff]
        %v814 = vld [vmem:[#allocation4 + $0x360] sm:$0xff]
        %v815 = vld [vmem:[#allocation4 + $0x368] sm:$0xff]
        %v816 = vld [vmem:[#allocation4 + $0x370] sm:$0xff]
        %v817 = vld [vmem:[#allocation4 + $0x378] sm:$0xff]
        %818 = vmatprep.subr.mxu0 0.0
        %819 = vmatpush1.msra.mxu0 %v721
        %820 = vmatprep.subr.mxu0 0.0
        %821 = vmatpush1.msra.mxu0 %v720
        %822 = vmatprep.subr.mxu0 0.0
        %823 = vmatpush1.msra.mxu0 %v719
        %824 = vmatprep.subr.mxu0 0.0
        %825 = vmatpush1.msra.mxu0 %v718
        %826 = vmatprep.subr.mxu0 0.0
        %827 = vmatpush1.msra.mxu0 %v717
        %828 = vmatprep.subr.mxu0 0.0
        %829 = vmatpush1.msra.mxu0 %v716
        %830 = vmatprep.subr.mxu0 0.0
        %831 = vmatpush1.msra.mxu0 %v715
        %832 = vmatprep.subr.mxu0 0.0
        %833 = vmatpush1.msra.mxu0 %v714
        %834 = vmatprep.subr.mxu0 0.0
        %835 = vmatpush1.msra.mxu0 %v713
        %836 = vmatprep.subr.mxu0 0.0
        %837 = vmatpush1.msra.mxu0 %v712
        %838 = vmatprep.subr.mxu0 0.0
        %839 = vmatpush1.msra.mxu0 %v711
        %840 = vmatprep.subr.mxu0 0.0
        %841 = vmatpush1.msra.mxu0 %v710
        %842 = vmatprep.subr.mxu0 0.0
        %843 = vmatpush1.msra.mxu0 %v709
        %844 = vmatprep.subr.mxu0 0.0
        %845 = vmatpush1.msra.mxu0 %v708
        %846 = vmatprep.subr.mxu0 0.0
        %847 = vmatpush1.msra.mxu0 %v707
        %848 = vmatprep.subr.mxu0 0.0
        %849 = vmatpush1.msra.mxu0 %v706
        %850 = vmatprep.subr.mxu0 0.0
        %851 = vmatpush2.msra.mxu0 %v737
        %852 = vmatprep.subr.mxu0 0.0
        %853 = vmatpush2.msra.mxu0 %v736
        %854 = vmatprep.subr.mxu0 0.0
        %855 = vmatpush2.msra.mxu0 %v735
        %856 = vmatprep.subr.mxu0 0.0
        %857 = vmatpush2.msra.mxu0 %v734
        %858 = vmatprep.subr.mxu0 0.0
        %859 = vmatpush2.msra.mxu0 %v733
        %860 = vmatprep.subr.mxu0 0.0
        %861 = vmatpush2.msra.mxu0 %v732
        %862 = vmatprep.subr.mxu0 0.0
        %863 = vmatpush2.msra.mxu0 %v731
        %864 = vmatprep.subr.mxu0 0.0
        %865 = vmatpush2.msra.mxu0 %v730
        %866 = vmatprep.subr.mxu0 0.0
        %867 = vmatpush2.msra.mxu0 %v729
        %868 = vmatprep.subr.mxu0 0.0
        %869 = vmatpush2.msra.mxu0 %v728
        %870 = vmatprep.subr.mxu0 0.0
        %871 = vmatpush2.msra.mxu0 %v727
        %872 = vmatprep.subr.mxu0 0.0
        %873 = vmatpush2.msra.mxu0 %v726
        %874 = vmatprep.subr.mxu0 0.0
        %875 = vmatpush2.msra.mxu0 %v725
        %876 = vmatprep.subr.mxu0 0.0
        %877 = vmatpush2.msra.mxu0 %v724
        %878 = vmatprep.subr.mxu0 0.0
        %879 = vmatpush2.msra.mxu0 %v723
        %880 = vmatprep.subr.mxu0 0.0
        %881 = vmatpush2.msra.mxu0 %v722
        %882 = vmatprep.mubr.f32.mxu0 %v701
        %883 = vmatmul.mubr.f32.gmra.mxu0 %v700
        %v884 = vpop.f32.mrf.mxu0
        %v885 = vadd.f32 0.0, %v884
        %v886 = vpop.f32.mrf.mxu0
        %887 = vdwg.mxu0
        %888 = vmatprep.subr.mxu0 0.0
        %889 = vmatpush1.msra.mxu0 %v753
        %890 = vmatprep.subr.mxu0 0.0
        %891 = vmatpush1.msra.mxu0 %v752
        %892 = vmatprep.subr.mxu0 0.0
        %893 = vmatpush1.msra.mxu0 %v751
        %894 = vmatprep.subr.mxu0 0.0
        %895 = vmatpush1.msra.mxu0 %v750
        %896 = vmatprep.subr.mxu0 0.0
        %897 = vmatpush1.msra.mxu0 %v749
        %898 = vmatprep.subr.mxu0 0.0
        %899 = vmatpush1.msra.mxu0 %v748
        %900 = vmatprep.subr.mxu0 0.0
        %901 = vmatpush1.msra.mxu0 %v747
        %902 = vmatprep.subr.mxu0 0.0
        %903 = vmatpush1.msra.mxu0 %v746
        %904 = vmatprep.subr.mxu0 0.0
        %905 = vmatpush1.msra.mxu0 %v745
        %906 = vmatprep.subr.mxu0 0.0
        %907 = vmatpush1.msra.mxu0 %v744
        %908 = vmatprep.subr.mxu0 0.0
        %909 = vmatpush1.msra.mxu0 %v743
        %910 = vmatprep.subr.mxu0 0.0
        %911 = vmatpush1.msra.mxu0 %v742
        %912 = vmatprep.subr.mxu0 0.0
        %913 = vmatpush1.msra.mxu0 %v741
        %914 = vmatprep.subr.mxu0 0.0
        %915 = vmatpush1.msra.mxu0 %v740
        %916 = vmatprep.subr.mxu0 0.0
        %917 = vmatpush1.msra.mxu0 %v739
        %918 = vmatprep.subr.mxu0 0.0
        %919 = vmatpush1.msra.mxu0 %v738
        %920 = vmatprep.subr.mxu0 0.0
        %921 = vmatpush2.msra.mxu0 %v769
        %922 = vmatprep.subr.mxu0 0.0
        %923 = vmatpush2.msra.mxu0 %v768
        %924 = vmatprep.subr.mxu0 0.0
        %925 = vmatpush2.msra.mxu0 %v767
        %926 = vmatprep.subr.mxu0 0.0
        %927 = vmatpush2.msra.mxu0 %v766
        %928 = vmatprep.subr.mxu0 0.0
        %929 = vmatpush2.msra.mxu0 %v765
        %930 = vmatprep.subr.mxu0 0.0
        %931 = vmatpush2.msra.mxu0 %v764
        %932 = vmatprep.subr.mxu0 0.0
        %933 = vmatpush2.msra.mxu0 %v763
        %934 = vmatprep.subr.mxu0 0.0
        %935 = vmatpush2.msra.mxu0 %v762
        %936 = vmatprep.subr.mxu0 0.0
        %937 = vmatpush2.msra.mxu0 %v761
        %938 = vmatprep.subr.mxu0 0.0
        %939 = vmatpush2.msra.mxu0 %v760
        %940 = vmatprep.subr.mxu0 0.0
        %941 = vmatpush2.msra.mxu0 %v759
        %942 = vmatprep.subr.mxu0 0.0
        %943 = vmatpush2.msra.mxu0 %v758
        %944 = vmatprep.subr.mxu0 0.0
        %945 = vmatpush2.msra.mxu0 %v757
        %946 = vmatprep.subr.mxu0 0.0
        %947 = vmatpush2.msra.mxu0 %v756
        %948 = vmatprep.subr.mxu0 0.0
        %949 = vmatpush2.msra.mxu0 %v755
        %950 = vmatprep.subr.mxu0 0.0
        %951 = vmatpush2.msra.mxu0 %v754
        %952 = vmatprep.mubr.f32.mxu0 %v703
        %953 = vmatmul.mubr.f32.gmra.mxu0 %v702
        %v954 = vpop.f32.mrf.mxu0
        %v955 = vadd.f32 %v885, %v954
        %v956 = vpop.f32.mrf.mxu0
        %957 = vdwg.mxu0
        %958 = vmatprep.subr.mxu0 0.0
        %959 = vmatpush1.msra.mxu0 %v785
        %960 = vmatprep.subr.mxu0 0.0
        %961 = vmatpush1.msra.mxu0 %v784
        %962 = vmatprep.subr.mxu0 0.0
        %963 = vmatpush1.msra.mxu0 %v783
        %964 = vmatprep.subr.mxu0 0.0
        %965 = vmatpush1.msra.mxu0 %v782
        %966 = vmatprep.subr.mxu0 0.0
        %967 = vmatpush1.msra.mxu0 %v781
        %968 = vmatprep.subr.mxu0 0.0
        %969 = vmatpush1.msra.mxu0 %v780
        %970 = vmatprep.subr.mxu0 0.0
        %971 = vmatpush1.msra.mxu0 %v779
        %972 = vmatprep.subr.mxu0 0.0
        %973 = vmatpush1.msra.mxu0 %v778
        %974 = vmatprep.subr.mxu0 0.0
        %975 = vmatpush1.msra.mxu0 %v777
        %976 = vmatprep.subr.mxu0 0.0
        %977 = vmatpush1.msra.mxu0 %v776
        %978 = vmatprep.subr.mxu0 0.0
        %979 = vmatpush1.msra.mxu0 %v775
        %980 = vmatprep.subr.mxu0 0.0
        %981 = vmatpush1.msra.mxu0 %v774
        %982 = vmatprep.subr.mxu0 0.0
        %983 = vmatpush1.msra.mxu0 %v773
        %984 = vmatprep.subr.mxu0 0.0
        %985 = vmatpush1.msra.mxu0 %v772
        %986 = vmatprep.subr.mxu0 0.0
        %987 = vmatpush1.msra.mxu0 %v771
        %988 = vmatprep.subr.mxu0 0.0
        %989 = vmatpush1.msra.mxu0 %v770
        %990 = vmatprep.subr.mxu0 0.0
        %991 = vmatpush2.msra.mxu0 %v801
        %992 = vmatprep.subr.mxu0 0.0
        %993 = vmatpush2.msra.mxu0 %v800
        %994 = vmatprep.subr.mxu0 0.0
        %995 = vmatpush2.msra.mxu0 %v799
        %996 = vmatprep.subr.mxu0 0.0
        %997 = vmatpush2.msra.mxu0 %v798
        %998 = vmatprep.subr.mxu0 0.0
        %999 = vmatpush2.msra.mxu0 %v797
        %1000 = vmatprep.subr.mxu0 0.0
        %1001 = vmatpush2.msra.mxu0 %v796
        %1002 = vmatprep.subr.mxu0 0.0
        %1003 = vmatpush2.msra.mxu0 %v795
        %1004 = vmatprep.subr.mxu0 0.0
        %1005 = vmatpush2.msra.mxu0 %v794
        %1006 = vmatprep.subr.mxu0 0.0
        %1007 = vmatpush2.msra.mxu0 %v793
        %1008 = vmatprep.subr.mxu0 0.0
        %1009 = vmatpush2.msra.mxu0 %v792
        %1010 = vmatprep.subr.mxu0 0.0
        %1011 = vmatpush2.msra.mxu0 %v791
        %1012 = vmatprep.subr.mxu0 0.0
        %1013 = vmatpush2.msra.mxu0 %v790
        %1014 = vmatprep.subr.mxu0 0.0
        %1015 = vmatpush2.msra.mxu0 %v789
        %1016 = vmatprep.subr.mxu0 0.0
        %1017 = vmatpush2.msra.mxu0 %v788
        %1018 = vmatprep.subr.mxu0 0.0
        %1019 = vmatpush2.msra.mxu0 %v787
        %1020 = vmatprep.subr.mxu0 0.0
        %1021 = vmatpush2.msra.mxu0 %v786
        %1022 = vmatprep.mubr.f32.mxu0 %v705
        %1023 = vmatmul.mubr.f32.gmra.mxu0 %v704
        %v1024 = vpop.f32.mrf.mxu0
        %v1025 = vadd.f32 %v955, %v1024
        %v1026 = vpop.f32.mrf.mxu0
        %1027 = vdwg.mxu0
        %1028 = vmatprep.subr.mxu0 0.0
        %1029 = vmatpush1.msra.mxu0 %v817
        %1030 = vmatprep.subr.mxu0 0.0
        %1031 = vmatpush1.msra.mxu0 %v816
        %1032 = vmatprep.subr.mxu0 0.0
        %1033 = vmatpush1.msra.mxu0 %v815
        %1034 = vmatprep.subr.mxu0 0.0
        %1035 = vmatpush1.msra.mxu0 %v814
        %1036 = vmatprep.subr.mxu0 0.0
        %1037 = vmatpush1.msra.mxu0 %v813
        %1038 = vmatprep.subr.mxu0 0.0
        %1039 = vmatpush1.msra.mxu0 %v812
        %1040 = vmatprep.subr.mxu0 0.0
        %1041 = vmatpush1.msra.mxu0 %v811
        %1042 = vmatprep.subr.mxu0 0.0
        %1043 = vmatpush1.msra.mxu0 %v810
        %1044 = vmatprep.subr.mxu0 0.0
        %1045 = vmatpush1.msra.mxu0 %v809
        %1046 = vmatprep.subr.mxu0 0.0
        %1047 = vmatpush1.msra.mxu0 %v808
        %1048 = vmatprep.subr.mxu0 0.0
        %1049 = vmatpush1.msra.mxu0 %v807
        %1050 = vmatprep.subr.mxu0 0.0
        %1051 = vmatpush1.msra.mxu0 %v806
        %1052 = vmatprep.subr.mxu0 0.0
        %1053 = vmatpush1.msra.mxu0 %v805
        %1054 = vmatprep.subr.mxu0 0.0
        %1055 = vmatpush1.msra.mxu0 %v804
        %1056 = vmatprep.subr.mxu0 0.0
        %1057 = vmatpush1.msra.mxu0 %v803
        %1058 = vmatprep.subr.mxu0 0.0
        %1059 = vmatpush1.msra.mxu0 %v802
        %1060 = vmatprep.subr.mxu0 0.0
        %1061 = vmatpush2.msra.mxu0 0.0
        %1062 = vmatprep.subr.mxu0 0.0
        %1063 = vmatpush2.msra.mxu0 0.0
        %1064 = vmatprep.subr.mxu0 0.0
        %1065 = vmatpush2.msra.mxu0 0.0
        %1066 = vmatprep.subr.mxu0 0.0
        %1067 = vmatpush2.msra.mxu0 0.0
        %1068 = vmatprep.subr.mxu0 0.0
        %1069 = vmatpush2.msra.mxu0 0.0
        %1070 = vmatprep.subr.mxu0 0.0
        %1071 = vmatpush2.msra.mxu0 0.0
        %1072 = vmatprep.subr.mxu0 0.0
        %1073 = vmatpush2.msra.mxu0 0.0
        %1074 = vmatprep.subr.mxu0 0.0
        %1075 = vmatpush2.msra.mxu0 0.0
        %1076 = vmatprep.subr.mxu0 0.0
        %1077 = vmatpush2.msra.mxu0 0.0
        %1078 = vmatprep.subr.mxu0 0.0
        %1079 = vmatpush2.msra.mxu0 0.0
        %1080 = vmatprep.subr.mxu0 0.0
        %1081 = vmatpush2.msra.mxu0 0.0
        %1082 = vmatprep.subr.mxu0 0.0
        %1083 = vmatpush2.msra.mxu0 0.0
        %1084 = vmatprep.subr.mxu0 0.0
        %1085 = vmatpush2.msra.mxu0 0.0
        %1086 = vmatprep.subr.mxu0 0.0
        %1087 = vmatpush2.msra.mxu0 0.0
        %1088 = vmatprep.subr.mxu0 0.0
        %1089 = vmatpush2.msra.mxu0 0.0
        %1090 = vmatprep.subr.mxu0 0.0
        %1091 = vmatpush2.msra.mxu0 0.0
        %1092 = vmatprep.mubr.f32.mxu0 0.0
        %1093 = vmatmul.mubr.f32.gmra.mxu0 %v674
        %v1094 = vpop.f32.mrf.mxu0
        %v1095 = vadd.f32 %v1025, %v1094
        %v1096 = vpop.f32.mrf.mxu0
        %1097 = vdwg.mxu0
        %1098 = vst [vmem:[%s256] sm:$0xff] %v1095
        %p1099 = scmp.lt.s32.totalorder %s19, 1
        %s1100 = scalar_select %p1099, %s19, 1
        %s1101 = smul.addr %s1100, 8
        %s1102 = scalar_lea.vmem %s4, %s1101
        %p1103 = scmp.lt.s32.totalorder %s19, 1
        %s1104 = scalar_select %p1103, %s19, 1
        %s1105 = smul.addr %s1104, 8
        %s1106 = scalar_lea.vmem %s5, %s1105
        // Predicated region
        $region45: #{moe_forward.1} parent=35 // pred_check
          %p1107 = pneg %p126
        $region46: #{moe_forward.1} parent=35 // pred_check_branch
          %1109 = sbr.rel (%p1107) target = $region48
        $region47: #{moe_forward.1} parent=35 // pred_region
          _
        $region48: #{moe_forward.1} parent=35 // pred_fallthru
          _
        // Predicated region
        $region49: #{moe_forward.1} parent=35 // pred_check
          %p1110 = pneg %p152
        $region50: #{moe_forward.1} parent=35 // pred_check_branch
          %1112 = sbr.rel (%p1110) target = $region52
        $region51: #{moe_forward.1} parent=35 // pred_region
          _
        $region52: #{moe_forward.1} parent=35 // pred_fallthru
          _
      $region36: #{moe_forward.1} parent=5 // pred_fallthru
        _
      %p1113 = scmp.le.s32.totalorder 2, %s14
      // Predicated region
      $region53: #{moe_forward.1} parent=5 // pred_check
        %p1114 = pneg %p1113
      $region54: #{moe_forward.1} parent=5 // pred_check_branch
        %1116 = sbr.rel (%p1114) target = $region56
      $region55: #{moe_forward.1} parent=5 // pred_region
        %s1117 = ssub.s32 %s14, 2
        // Predicated region
        $region57: #{moe_forward.1} parent=55 // pred_check
          %p1118 = pneg %p132
        $region58: #{moe_forward.1} parent=55 // pred_check_branch
          %1120 = sbr.rel (%p1118) target = $region60
        $region59: #{moe_forward.1} parent=55 // pred_region
          %p1121 = scmp.lt.s32.totalorder %s20, 1
          %s1122 = scalar_select %p1121, %s20, 1
          %s1123 = smul.addr %s1122, 8
          %s1124 = scalar_lea.vmem %s4, %s1123
        $region60: #{moe_forward.1} parent=55 // pred_fallthru
          _
        // Predicated region
        $region61: #{moe_forward.1} parent=55 // pred_check
          %p1125 = pneg %p158
        $region62: #{moe_forward.1} parent=55 // pred_check_branch
          %1127 = sbr.rel (%p1125) target = $region64
        $region63: #{moe_forward.1} parent=55 // pred_region
          %p1128 = scmp.lt.s32.totalorder %s20, 1
          %s1129 = scalar_select %p1128, %s20, 1
          %s1130 = smul.addr %s1129, 8
          %s1131 = scalar_lea.vmem %s5, %s1130
        $region64: #{moe_forward.1} parent=55 // pred_fallthru
          _
      $region56: #{moe_forward.1} parent=5 // pred_fallthru
        _
    $region6: #{moe_forward.1} parent=1 // loop_footer
      %s18 = sadd.s32 1, %s14
    $region7: #{moe_forward.1} parent=1 // loop_footer_branch
      %13 = sbr.rel target = $region3
    $region8: #{moe_forward.1} parent=1 // loop_exit
      _
    %1132 = vsyncpa [#allocation3], 1
    %s1133 = scalar_lea.sflag [#allocation3], 1
    %1134 = vsyncpa %s1133, 1
    %1135 = vsyncpa [#allocation5], 1

</llo_original>
